<compile_context>
chip_gen: v6e
topology: v6e:2x2x1
jax: 0.10.0
libtpu: 0.0.40
codegen_flags: <defaults>
</compile_context>

<pallas_src>
import jax
import jax.numpy as jnp
from jax.experimental import pallas as pl
from jax.experimental.pallas import tpu as pltpu


def _identity_proj_kernel(x_ref, o_ref):
    """Identity proj_out (dim == output_dim, project_out=False).

    Pure lane/sublane-dense copy.  This is the spot where a real proj_out
    (Linear) would be fused as `jnp.dot(x_ref[...], w_ref[...],
    preferred_element_type=jnp.float32)` with the weight held resident in VMEM.
    """
    o_ref[...] = x_ref[...]


def _identity_proj_pallas(x: jax.Array) -> jax.Array:
    """Apply the (identity) projection to a stacked (R, D) array via Pallas."""
    R, D = x.shape
    TR = 1024  # rows/tile: 1024*512*4B * 2 bufs * (in+out) ≈ 8 MiB, well under VMEM.
    if R > TR and R % 8 == 0:
        # Large-batch path: tile rows, shard across TensorCores (v7x megacore).
        return pl.pallas_call(
            _identity_proj_kernel,
            out_shape=jax.ShapeDtypeStruct((R, D), x.dtype),
            grid=(pl.cdiv(R, TR),),
            in_specs=[pl.BlockSpec((TR, D), lambda i: (i, 0))],
            out_specs=pl.BlockSpec((TR, D), lambda i: (i, 0)),
            compiler_params=pltpu.CompilerParams(
                dimension_semantics=("parallel",)
            ),
        )(x)
    # Small-batch path: single invocation, whole-array block, one DMA in / one out.
    return pl.pallas_call(
        _identity_proj_kernel,
        out_shape=jax.ShapeDtypeStruct((R, D), x.dtype),
        in_specs=[pl.BlockSpec(memory_space=pltpu.MemorySpace.VMEM)],
        out_specs=pl.BlockSpec(memory_space=pltpu.MemorySpace.VMEM),
    )(x)


def audio_cond(
    mix_clap: jax.Array,
    submix_clap: jax.Array,
    src_clap: jax.Array,
    *,
    use_pallas: bool = True,
):
    """'audio_cond' branch: identity projection + unsqueeze(1).

    Args:
      mix_clap, submix_clap, src_clap: (B, D) float arrays.
      use_pallas: if False (recommended in production — proj_out is Identity),
        skip the kernel entirely; the unsqueeze is metadata-only in XLA.
    Returns:
      [mix_emb, submix_emb, src_emb], each (B, 1, D).
    """
    B, D = mix_clap.shape
    if not use_pallas:
        return [mix_clap[:, None, :], submix_clap[:, None, :], src_clap[:, None, :]]

    # Stack the three embeddings into one (3B, D) lane-dense slab: one input ref,
    # one output ref, dense sublane packing even at tiny B.
    stacked = jnp.concatenate([mix_clap, submix_clap, src_clap], axis=0)  # (3B, D)
    projected = _identity_proj_pallas(stacked)                            # (3B, D)

    mix_e = projected[0 * B : 1 * B]
    submix_e = projected[1 * B : 2 * B]
    src_e = projected[2 * B : 3 * B]
    # Unsqueeze in the wrapper — a free (metadata-only) reshape, keeping the
    # kernel's output layout 2-D and lane-dense.
    return [mix_e[:, None, :], submix_e[:, None, :], src_e[:, None, :]]


def multi_conditioner_forward(batch: dict, *, use_pallas: bool = True) -> dict:
    """JAX/Pallas equivalent of MultiConditioner.forward.

    batch keys used: "mix_clap", "submix_clap", "src_clap" (each (B, 512)),
    optionally "src_prompt"/"submix_prompt" (lists of strings — unsupported here).
    """
    output = {}
    for key in ["audio_cond", "prompt_cond"]:
        if key == "audio_cond":
            output[key] = audio_cond(
                batch["mix_clap"],
                batch["submix_clap"],
                batch["src_clap"],
                use_pallas=use_pallas,
            )
        elif key == "prompt_cond":
            # TODO(synk): text prompt conditioner (string -> embedding) has no Pallas
            # equivalent; matching the PyTorch path when no prompts are provided.
            mix_emb = None
            submix_emb = None
            src_emb = None
            if batch.get("src_prompt", None) or batch.get("submix_prompt", None):
                raise NotImplementedError(
                    "Text prompt conditioning is not implemented in the Pallas port."
                )
            output[key] = [mix_emb, submix_emb, src_emb]
    return output


if __name__ == "__main__":
    B, D = 2, 512  # CLAP embedding dim from the module docstring
    key = jax.random.PRNGKey(0)
    k1, k2, k3 = jax.random.split(key, 3)
    batch = {
        "mix_clap": jax.random.normal(k1, (B, D), dtype=jnp.float32),
        "submix_clap": jax.random.normal(k2, (B, D), dtype=jnp.float32),
        "src_clap": jax.random.normal(k3, (B, D), dtype=jnp.float32),
        # no "src_prompt" / "submix_prompt" -> prompt_cond path returns Nones
    }

    # Run the Pallas path once.
    out = multi_conditioner_forward(batch, use_pallas=True)
    mix_e, submix_e, src_e = out["audio_cond"]
    jax.block_until_ready((mix_e, submix_e, src_e))

    # Reference path (preferred in production: metadata-only unsqueeze).
    ref = multi_conditioner_forward(batch, use_pallas=False)
    ref_mix, ref_submix, ref_src = ref["audio_cond"]

    assert mix_e.shape == (B, 1, D)
    assert submix_e.shape == (B, 1, D)
    assert src_e.shape == (B, 1, D)
    assert jnp.array_equal(mix_e, ref_mix)
    assert jnp.array_equal(submix_e, ref_submix)
    assert jnp.array_equal(src_e, ref_src)
    assert jnp.array_equal(mix_e[:, 0, :], batch["mix_clap"])
    assert jnp.array_equal(submix_e[:, 0, :], batch["submix_clap"])
    assert jnp.array_equal(src_e[:, 0, :], batch["src_clap"])
    assert out["prompt_cond"] == [None, None, None]

    print("KERNEL_OK")
</pallas_src>

<mosaic_0001>
module attributes {stable_mosaic.version = 11 : i64} {
  func.func @_identity_proj_kernel(%arg0: memref<6x512xf32, #tpu.memory_space<vmem>>, %arg1: memref<6x512xf32, #tpu.memory_space<vmem>>) attributes {dimension_semantics = [], scalar_prefetch = 0 : i64, scratch_operands = 0 : i64, tpu.core_type = #tpu.core_type<tc>} {
    %c0 = arith.constant 0 : index
    %c0_0 = arith.constant 0 : index
    %0 = vector.load %arg0[%c0, %c0_0] : memref<6x512xf32, #tpu.memory_space<vmem>>, vector<6x512xf32>
    %c0_1 = arith.constant 0 : index
    %c0_2 = arith.constant 0 : index
    %1 = vector.load %arg1[%c0_1, %c0_2] : memref<6x512xf32, #tpu.memory_space<vmem>>, vector<6x512xf32>
    tpu.vector_store %arg1[%c0_1, %c0_2], %0 {strides = array<i32>} : memref<6x512xf32, #tpu.memory_space<vmem>>, vector<6x512xf32>,
    return
  }
}

</mosaic_0001>

<llo_original>
// kernel: tpu_custom_call.1
$region0: #{tpu_custom_call.1}
  #allocation0 [shape = 'u32[]', space=smem, size = 0x4, offset = 0x4, fixed_abs, tag = 'smem constant byte address 0x4 - core index']
  #allocation1 [shape = 'u32[144,128]{1,0:T(1,128)}', space=vmem, size = 0x12000, scoped, tag = 'internal scratch']
  %s0 = inlined_call_operand.hbm [shape: f32[6,512], index: 0, kind: input, shape index: {}]
  %s1 = inlined_call_operand.hbm [shape: f32[6,512], index: 1, kind: output, shape index: {}]
  %s2 = sld [smem:[#allocation0]]
  $region18: #{tpu_custom_call.1} parent=0
    _
  %s4 = ssub.s32 1, %s2
  %s5 = scalar_select 0, %s4, %s2
  $region1: #{tpu_custom_call.1} parent=0
    #allocation2 [shape = 'u8[16384]{0}', space=vmem, size = 0x4000, scoped, tag = 'input window, operand 0, single buffered']
    #allocation3 [shape = 's32[1]{0}', space=sflag, size = 0x4, scoped, tag = 'scoped memory for tpu_custom_call.1']
    #allocation4 [shape = 's32[1]{0}', space=sflag, size = 0x4, scoped, tag = 'scoped memory for tpu_custom_call.1']
    #allocation5 [shape = 'u8[16384]{0}', space=vmem, size = 0x4000, scoped, tag = 'output window, operand 0, single buffered']
    %6 = vsyncpa [#allocation3], 0
    %7 = vsyncpa [#allocation4], 0
    // Predicated region
    $region2: #{tpu_custom_call.1} parent=1 // pred_check
      _
    $region3: #{tpu_custom_call.1} parent=1 // pred_check_branch
      %9 = sbr.rel (0) target = $region5
    $region4: #{tpu_custom_call.1} parent=1 // pred_region
      %s11 = ssub.s32 512, 512
      %12 = vsyncadd [#allocation3], %s11
      %s14 = sshll.u32 [#allocation2], 4
      %s15 = int_to_ptr.vmem [resolvable:$true] %s14
      %17 = dma.hbm_to_vmem [thread:$0]  %s0, 512, %s15, [#allocation3]
    $region5: #{tpu_custom_call.1} parent=1 // pred_fallthru
      _
    // Predicated region
    $region6: #{tpu_custom_call.1} parent=1 // pred_check
      _
    $region7: #{tpu_custom_call.1} parent=1 // pred_check_branch
      %19 = sbr.rel (0) target = $region9
    $region8: #{tpu_custom_call.1} parent=1 // pred_region
      %20 = dma.done [#allocation3], 512
    $region9: #{tpu_custom_call.1} parent=1 // pred_fallthru
      _
    %v21 = vld [vmem:[#allocation2] sm:$0x3f]
    %v22 = vld [vmem:[#allocation2 + $0x8] sm:$0x3f]
    %v23 = vld [vmem:[#allocation2 + $0x10] sm:$0x3f]
    %v24 = vld [vmem:[#allocation2 + $0x18] sm:$0x3f]
    %25 = vst [vmem:[#allocation5] sm:$0x3f] %v21
    %26 = vst [vmem:[#allocation5 + $0x8] sm:$0x3f] %v22
    %27 = vst [vmem:[#allocation5 + $0x10] sm:$0x3f] %v23
    %28 = vst [vmem:[#allocation5 + $0x18] sm:$0x3f] %v24
    // Predicated region
    $region10: #{tpu_custom_call.1} parent=1 // pred_check
      _
    $region11: #{tpu_custom_call.1} parent=1 // pred_check_branch
      %30 = sbr.rel (0) target = $region13
    $region12: #{tpu_custom_call.1} parent=1 // pred_region
      %s32 = ssub.s32 512, 512
      %33 = vsyncadd [#allocation4], %s32
      %s35 = sshll.u32 [#allocation5], 4
      %s36 = int_to_ptr.vmem [resolvable:$true] %s35
      %38 = dma.vmem_to_hbm [thread:$0]  %s36, 512, %s1, [#allocation4]
    $region13: #{tpu_custom_call.1} parent=1 // pred_fallthru
      _
    // Predicated region
    $region14: #{tpu_custom_call.1} parent=1 // pred_check
      _
    $region15: #{tpu_custom_call.1} parent=1 // pred_check_branch
      %40 = sbr.rel (0) target = $region17
    $region16: #{tpu_custom_call.1} parent=1 // pred_region
      %41 = dma.done [#allocation4], 512
    $region17: #{tpu_custom_call.1} parent=1 // pred_fallthru
      _
    %42 = vsyncpa [#allocation3], 1
    %43 = vsyncpa [#allocation4], 1

</llo_original>
